<compile_context>
chip_gen: v5e
topology: v5e:2x2
jax: 0.10.0
libtpu: 0.0.40
codegen_flags: <defaults>
</compile_context>

<pallas_src>
import functools
import math

import jax
import jax.numpy as jnp
from jax.experimental import pallas as pl
from jax.experimental.pallas import tpu as pltpu


# Per-grid-step working set (inputs + output, double-buffering included) and
# the scoped-VMEM limit handed to Mosaic.
_VMEM_BLOCK_BUDGET = 20 * 1024 * 1024
_VMEM_LIMIT_BYTES = 48 * 1024 * 1024
_MAX_ROW_TILE = 4096
_MAX_LANE_TILE = 2048


def _sublane_min(itemsize: int) -> int:
    # Minimum legal sublane tile by element width: f32 -> 8, bf16 -> 16, int8/fp8 -> 32.
    return {4: 8, 2: 16, 1: 32}.get(itemsize, 8)


def _round_up(x: int, m: int) -> int:
    return ((x + m - 1) // m) * m


def _pick_lane_tile_dense(L: int) -> int:
    """Largest divisor of L that is a multiple of 128 and <= _MAX_LANE_TILE.
    Caller guarantees L % 128 == 0, so a valid tile always exists."""
    if L <= _MAX_LANE_TILE:
        return L
    n = L // 128
    cap = _MAX_LANE_TILE // 128
    best = 1
    d = 1
    while d * d <= n:
        if n % d == 0:
            for cand in (d, n // d):
                if cand <= cap and cand > best:
                    best = cand
        d += 1
    return best * 128


def _legal_row_tile(rt: int, m: int, sub: int) -> int:
    """Row tiles become the second-to-last dim of 2-D blocks: must be a
    multiple of the dtype sublane minimum, or the full extent."""
    if rt >= m:
        return m
    rt = (rt // sub) * sub
    if rt < sub:
        return m  # cannot tile rows legally; fall back to the full extent
    return rt


def _maybe_split_rows(rt: int, m: int, sub: int, col_steps: int) -> int:
    """Guarantee >= 2 grid steps whenever legal so v7x's two TensorCores both
    stream (harmless no-op on single-core v5e/v6e)."""
    if col_steps > 1 or rt < m:
        return rt
    half = _round_up(pl.cdiv(m, 2), sub)
    return half if half < m else rt


def _glu_kernel_dense(a_ref, g_ref, o_ref):
    # out = a * sigmoid(g); compute in f32 (required on v5e, harmless elsewhere).
    a = a_ref[...].astype(jnp.float32)
    g = g_ref[...].astype(jnp.float32)
    o_ref[...] = (a * jax.nn.sigmoid(g)).astype(o_ref.dtype)


def _glu_kernel_packed(x_ref, o_ref):
    # x_ref: (rows, 2, ct) — halves stacked on the (full-extent) middle axis.
    x = x_ref[...]
    a = x[:, 0, :].astype(jnp.float32)
    g = x[:, 1, :].astype(jnp.float32)
    o_ref[...] = (a * jax.nn.sigmoid(g)).astype(o_ref.dtype)


def _glu_lane_dense(x2d, L: int):
    """x2d: (m, 2*L), L % 128 == 0; halves are column ranges [0, L) / [L, 2L)."""
    m, _ = x2d.shape
    itemsize = jnp.dtype(x2d.dtype).itemsize
    sub = _sublane_min(itemsize)

    ct = _pick_lane_tile_dense(L)
    col_blocks = L // ct

    # Per grid step (double-buffered): 2 input blocks + 1 output block.
    bytes_per_row = 2 * 3 * ct * itemsize
    rt = max(1, _VMEM_BLOCK_BUDGET // bytes_per_row)
    rt = min(rt, _MAX_ROW_TILE, m)
    rt = _legal_row_tile(rt, m, sub)
    rt = _maybe_split_rows(rt, m, sub, col_blocks)

    grid = (pl.cdiv(m, rt), col_blocks)

    return pl.pallas_call(
        _glu_kernel_dense,
        out_shape=jax.ShapeDtypeStruct((m, L), x2d.dtype),
        grid_spec=pltpu.PrefetchScalarGridSpec(
            num_scalar_prefetch=0,
            grid=grid,
            in_specs=[
                # outputs half: columns [j*ct, (j+1)*ct)
                pl.BlockSpec((rt, ct), lambda i, j: (i, j)),
                # gate half: columns [L + j*ct, L + (j+1)*ct)
                pl.BlockSpec((rt, ct), lambda i, j: (i, j + col_blocks)),
            ],
            out_specs=pl.BlockSpec((rt, ct), lambda i, j: (i, j)),
        ),
        compiler_params=pltpu.CompilerParams(
            dimension_semantics=("parallel", "parallel"),
            vmem_limit_bytes=_VMEM_LIMIT_BYTES,
        ),
    )(x2d, x2d)


def _glu_ragged(x3d):
    """x3d: (pre, 2, L) with L % 128 != 0.  One input block carries both
    halves on the full-extent middle axis (so the (8,128) block rule always
    holds); the lane axis is cdiv-tiled so only the last block is masked."""
    pre, _two, L = x3d.shape
    itemsize = jnp.dtype(x3d.dtype).itemsize
    sub = _sublane_min(itemsize)

    ct = L if L <= _MAX_LANE_TILE else _MAX_LANE_TILE
    col_blocks = pl.cdiv(L, ct)
    ct_pad = _round_up(ct, 128)

    # Input block (rt, 2, ct): its (2, ct) minor block pads to (sub, ct_pad)
    # in VMEM; the output block (rt, ct) is dense.  Both double-buffered.
    bytes_per_row = 2 * (sub * ct_pad + ct_pad) * itemsize
    rt = max(1, _VMEM_BLOCK_BUDGET // bytes_per_row)
    rt = min(rt, _MAX_ROW_TILE, pre)
    rt = _legal_row_tile(rt, pre, sub)
    rt = _maybe_split_rows(rt, pre, sub, col_blocks)

    grid = (pl.cdiv(pre, rt), col_blocks)

    return pl.pallas_call(
        _glu_kernel_packed,
        out_shape=jax.ShapeDtypeStruct((pre, L), x3d.dtype),
        grid_spec=pltpu.PrefetchScalarGridSpec(
            num_scalar_prefetch=0,
            grid=grid,
            in_specs=[pl.BlockSpec((rt, 2, ct), lambda i, j: (i, 0, j))],
            out_specs=pl.BlockSpec((rt, ct), lambda i, j: (i, j)),
        ),
        compiler_params=pltpu.CompilerParams(
            dimension_semantics=("parallel", "parallel"),
            vmem_limit_bytes=_VMEM_LIMIT_BYTES,
        ),
    )(x3d)


@functools.partial(jax.jit, static_argnames=("dim",))
def glu(inputs, dim: int = -1):
    """Pallas GLU matching torch: chunk(2, dim) -> outputs * sigmoid(gate)."""
    ndim = inputs.ndim
    axis = dim % ndim
    c = inputs.shape[axis]
    assert c % 2 == 0, "GLU split axis must be even"
    hc = c // 2

    pre = int(math.prod(inputs.shape[:axis]))
    post = int(math.prod(inputs.shape[axis + 1:]))
    L = hc * post  # per-half trailing length once the split axis is factored
    out_shape = inputs.shape[:axis] + (hc,) + inputs.shape[axis + 1:]

    # Only contiguous (free) reshapes: the split factors as (pre, 2, L); no
    # transpose / moveaxis and no extra HBM pass regardless of `dim`.
    if L % 128 == 0:
        out2d = _glu_lane_dense(inputs.reshape(pre, 2 * L), L)
    else:
        out2d = _glu_ragged(inputs.reshape(pre, 2, L))
    return out2d.reshape(out_shape)


def glu_reference(inputs, dim: int = -1):
    a, g = jnp.split(inputs, 2, axis=dim)
    return a * jax.nn.sigmoid(g)


if __name__ == "__main__":
    key = jax.random.PRNGKey(0)
    k1, k2, k3, k4 = jax.random.split(key, 4)

    # Case 1: last-dim GLU with a ragged (non-128) half-width.
    x1 = jax.random.normal(k1, (2, 8, 64), dtype=jnp.float32)
    y1 = jax.block_until_ready(glu(x1, dim=-1))
    assert y1.shape == (2, 8, 32), y1.shape
    assert jnp.allclose(y1, glu_reference(x1, dim=-1), atol=1e-6, rtol=1e-6)

    # Case 2: channel-dim GLU on an NCHW-ish tensor — trailing axes collapse
    # into one lane-dense axis (no moveaxis / transpose glue).
    x2 = jax.random.normal(k2, (2, 4, 16, 16), dtype=jnp.float32)
    y2 = jax.block_until_ready(glu(x2, dim=1))
    assert y2.shape == (2, 2, 16, 16), y2.shape
    assert jnp.allclose(y2, glu_reference(x2, dim=1), atol=1e-6, rtol=1e-6)

    # Case 3: bf16 last-dim case with a lane-dense (multiple-of-128) half.
    x3 = jax.random.normal(k3, (4, 8, 512), dtype=jnp.bfloat16)
    y3 = jax.block_until_ready(glu(x3, dim=-1))
    ref3 = glu_reference(x3.astype(jnp.float32), dim=-1)
    assert y3.shape == (4, 8, 256), y3.shape
    assert jnp.allclose(y3.astype(jnp.float32), ref3, atol=2e-2, rtol=2e-2)

    # Case 4: ragged inner-dim split (odd trailing sizes) — exercises the
    # packed (rows, 2, ct) fallback path.
    x4 = jax.random.normal(k4, (2, 6, 5, 7), dtype=jnp.float32)
    y4 = jax.block_until_ready(glu(x4, dim=1))
    assert y4.shape == (2, 3, 5, 7), y4.shape
    assert jnp.allclose(y4, glu_reference(x4, dim=1), atol=1e-6, rtol=1e-6)

    print("KERNEL_OK")
</pallas_src>

<mosaic_0001>
module attributes {stable_mosaic.version = 11 : i64} {
  func.func @_glu_kernel_packed(%arg0: i32, %arg1: i32, %arg2: memref<8x2x32xf32, #tpu.memory_space<vmem>>, %arg3: memref<8x32xf32, #tpu.memory_space<vmem>>) attributes {dimension_semantics = [#tpu.dimension_semantics<parallel>, #tpu.dimension_semantics<parallel>], iteration_bounds = array<i64: 2, 1>, scalar_prefetch = 0 : i64, scratch_operands = 0 : i64, tpu.core_type = #tpu.core_type<tc>, window_params = [{transform_indices = @transform_0, window_bounds = array<i64: 8, 2, 32>}, {transform_indices = @transform_1, window_bounds = array<i64: 8, 32>}]} {
    %c0 = arith.constant 0 : index
    %c0_0 = arith.constant 0 : index
    %c0_1 = arith.constant 0 : index
    %0 = vector.load %arg2[%c0, %c0_0, %c0_1] : memref<8x2x32xf32, #tpu.memory_space<vmem>>, vector<8x2x32xf32>
    %1 = vector.extract_strided_slice %0 {offsets = [0, 0, 0], sizes = [8, 1, 32], strides = [1, 1, 1]} : vector<8x2x32xf32> to vector<8x1x32xf32>
    %2 = vector.shape_cast %1 : vector<8x1x32xf32> to vector<8x32xf32>
    %3 = vector.extract_strided_slice %0 {offsets = [0, 1, 0], sizes = [8, 1, 32], strides = [1, 1, 1]} : vector<8x2x32xf32> to vector<8x1x32xf32>
    %4 = vector.shape_cast %3 : vector<8x1x32xf32> to vector<8x32xf32>
    %5 = arith.negf %4 : vector<8x32xf32>
    %6 = math.exp %5 : vector<8x32xf32>
    %cst = arith.constant 1.000000e+00 : f32
    %7 = vector.broadcast %cst : f32 to vector<8x32xf32>
    %8 = arith.addf %7, %6 : vector<8x32xf32>
    %9 = arith.divf %7, %8 : vector<8x32xf32>
    %10 = arith.mulf %2, %9 : vector<8x32xf32>
    %c0_2 = arith.constant 0 : index
    %c0_3 = arith.constant 0 : index
    %11 = vector.load %arg3[%c0_2, %c0_3] : memref<8x32xf32, #tpu.memory_space<vmem>>, vector<8x32xf32>
    tpu.vector_store %arg3[%c0_2, %c0_3], %10 {strides = array<i32>} : memref<8x32xf32, #tpu.memory_space<vmem>>, vector<8x32xf32>,
    return
  }
  func.func @transform_0(%arg0: i32, %arg1: i32) -> (i32, i32, i32) {
    %c0_i32 = arith.constant 0 : i32
    %c0_i32_0 = arith.constant 0 : i32
    return %arg0, %c0_i32, %arg1 : i32, i32, i32
  }
  func.func @transform_1(%arg0: i32, %arg1: i32) -> (i32, i32) {
    %c0_i32 = arith.constant 0 : i32
    return %arg0, %arg1 : i32, i32
  }
}

</mosaic_0001>

<llo_original>
// kernel: glu.1
$region0: #{glu.1}
  #allocation0 [shape = 'u32[]', space=smem, size = 0x4, offset = 0x4, fixed_abs, tag = 'smem constant byte address 0x4 - core index']
  #allocation1 [shape = 'u32[72,128]{1,0:T(1,128)}', space=vmem, size = 0x9000, scoped, tag = 'internal scratch']
  %s0 = inlined_call_operand.vmem [shape: f32[16,2,32], index: 0, kind: input, shape index: {}]
  %s1 = inlined_call_operand.hbm [shape: f32[16,32], index: 1, kind: output, shape index: {}]
  %s2 = sld [smem:[#allocation0]]
  $region37: #{glu.1} parent=0
    _
  %s4 = ssub.s32 1, %s2
  %s5 = scalar_select 0, %s4, %s2
  $region1: #{glu.1} parent=0
    #allocation2 [shape = 'u8[8192]{0}', space=vmem, size = 0x2000, scoped, tag = 'output window, operand 0']
    #allocation3 [shape = 's32[2]{0}', space=sflag, size = 0x8, scoped, tag = 'scoped memory for glu.1']
    %6 = vsyncpa [#allocation3], 0
    %s7 = scalar_lea.sflag [#allocation3], 1
    %8 = vsyncpa %s7, 0
    loop: start=0, step=1, limit=4
    $region2: #{glu.1} parent=1 // loop_pre_header
      _
    $region3: #{glu.1} parent=1 // loop_header
      %s10 = sphi 0, %s14
      %p11 = scmp.ge.s32.totalorder %s10, 4
      %s17 = sphi 0, %s29
      %s18 = sphi 0, %s25
      %s19 = sphi 0, %s17
      %s20 = sphi 0, %s18
      %s21 = sphi 0, %s19
      %s22 = sphi 0, %s20
      %s34 = sphi 0, %s36
      %s37 = sphi 0, %s34
      %s38 = sphi 0, %s37
      %s54 = sphi 0, %s38
      %s62 = sphi 0, %s64
      %s65 = sphi 0, %s62
      %s66 = sphi 0, %s65
      %s82 = sphi 0, %s66
    $region4: #{glu.1} parent=1 // loop_header_branch
      %13 = sbr.rel (%p11) target = $region8
    $region5: #{glu.1} parent=1 // loop_body
      %s15 = ssub.s32 %s10, 1
      %s16 = ssub.s32 %s10, 2
      %s23 = sadd.s32 1, %s18
      %p24 = scmp.ge.s32.totalorder %s23, 1
      %s25 = scalar_select %p24, 0, %s23
      %s26 = sadd.s32 1, %s17
      %s27 = scalar_select %p24, %s26, %s17
      %p28 = scmp.ge.s32.totalorder %s27, 2
      %s29 = scalar_select %p28, 0, %s27
      %s30 = ssub.s32 %s17, %s29
      %s31 = ssub.s32 %s18, %s25
      %s32 = sor.u32 %s30, %s31
      %p33 = scmp.eq.s32.totalorder %s32, 0
      %s35 = sadd.s32 %s34, 1
      %s36 = scalar_select %p33, %s34, %s35
      %p39 = pneg %p33
      %p40 = scmp.eq.s32.totalorder %s10, 1
      %p41 = por %p39, %p40
      %p42 = scmp.ne.s32.totalorder %s34, %s37
      %p43 = scmp.eq.s32.totalorder %s10, 0
      %p44 = por %p42, %p43
      %p45 = scmp.ne.s32.totalorder %s34, %s37
      %p46 = scmp.eq.s32.totalorder %s15, 1
      %p47 = por %p45, %p46
      %p48 = scmp.ne.s32.totalorder %s37, %s38
      %p49 = scmp.eq.s32.totalorder %s15, 0
      %p50 = por %p48, %p49
      %p51 = scmp.ne.s32.totalorder %s37, %s38
      %p52 = scmp.eq.s32.totalorder %s16, 1
      %p53 = por %p51, %p52
      %p55 = scmp.ne.s32.totalorder %s38, %s54
      %p56 = scmp.eq.s32.totalorder %s16, 0
      %p57 = por %p55, %p56
      %s58 = ssub.s32 %s17, %s29
      %s59 = ssub.s32 %s18, %s25
      %s60 = sor.u32 %s58, %s59
      %p61 = scmp.eq.s32.totalorder %s60, 0
      %s63 = sadd.s32 %s62, 1
      %s64 = scalar_select %p61, %s62, %s63
      %p67 = pneg %p61
      %p68 = scmp.eq.s32.totalorder %s10, 1
      %p69 = por %p67, %p68
      %p70 = scmp.ne.s32.totalorder %s62, %s65
      %p71 = scmp.eq.s32.totalorder %s10, 0
      %p72 = por %p70, %p71
      %p73 = scmp.ne.s32.totalorder %s62, %s65
      %p74 = scmp.eq.s32.totalorder %s15, 1
      %p75 = por %p73, %p74
      %p76 = scmp.ne.s32.totalorder %s65, %s66
      %p77 = scmp.eq.s32.totalorder %s15, 0
      %p78 = por %p76, %p77
      %p79 = scmp.ne.s32.totalorder %s65, %s66
      %p80 = scmp.eq.s32.totalorder %s16, 1
      %p81 = por %p79, %p80
      %p83 = scmp.ne.s32.totalorder %s66, %s82
      %p84 = scmp.eq.s32.totalorder %s16, 0
      %p85 = por %p83, %p84
      %p86 = scmp.le.s32.totalorder 1, %s10
      %p87 = scmp.lt.s32.totalorder %s10, 3
      %p88 = pnand %p86, %p87
      %p89 = pneg %p88
      // Predicated region
      $region9: #{glu.1} parent=5 // pred_check
        _
      $region10: #{glu.1} parent=5 // pred_check_branch
        %91 = sbr.rel (%p88) target = $region12
      $region11: #{glu.1} parent=5 // pred_region
        %s92 = ssub.s32 %s10, 1
      $region12: #{glu.1} parent=5 // pred_fallthru
        _
      %p93 = scmp.lt.s32.totalorder %s10, 2
      // Predicated region
      $region13: #{glu.1} parent=5 // pred_check
        %p94 = pneg %p93
      $region14: #{glu.1} parent=5 // pred_check_branch
        %96 = sbr.rel (%p94) target = $region16
      $region15: #{glu.1} parent=5 // pred_region
        // Predicated region
        $region17: #{glu.1} parent=15 // pred_check
          %p97 = pneg %p44
        $region18: #{glu.1} parent=15 // pred_check_branch
          %99 = sbr.rel (%p97) target = $region20
        $region19: #{glu.1} parent=15 // pred_region
          %s100 = smul.u32 8, %s17
          %p101 = scmp.lt.s32.totalorder %s100, 15
          %s102 = scalar_select %p101, %s100, 15
          %p103 = scmp.lt.s32.totalorder %s18, 0
          %s104 = scalar_select %p103, %s18, 0
          %s105 = sadd.s32 %s104, %s102
          %s106 = smul.addr %s105, 2
          %s107 = scalar_lea.vmem %s0, %s106
          %s108 = smul.u32 8, %s17
        $region20: #{glu.1} parent=15 // pred_fallthru
          _
      $region16: #{glu.1} parent=5 // pred_fallthru
        _
      %p109 = scmp.le.s32.totalorder 1, %s10
      %p110 = scmp.lt.s32.totalorder %s10, 3
      %p111 = pnand %p109, %p110
      %p112 = pneg %p111
      // Predicated region
      $region21: #{glu.1} parent=5 // pred_check
        _
      $region22: #{glu.1} parent=5 // pred_check_branch
        %114 = sbr.rel (%p111) target = $region24
      $region23: #{glu.1} parent=5 // pred_region
        %s115 = ssub.s32 %s10, 1
        %s116 = smul.u32 8, %s19
        %p117 = scmp.lt.s32.totalorder %s116, 15
        %s118 = scalar_select %p117, %s116, 15
        %p119 = scmp.lt.s32.totalorder %s20, 0
        %s120 = scalar_select %p119, %s20, 0
        %s121 = sadd.s32 %s120, %s118
        %s122 = smul.addr %s121, 2
        %s123 = scalar_lea.vmem %s0, %s122
        %p124 = pneg %p50
        %p125 = pneg %p47
        %p126 = pneg %p78
        %p127 = pneg %p75
        %s128 = sand.u32 %s65, 1
        %s129 = scalar_lea.sflag [#allocation3], %s128
        %s130 = sand.u32 %s65, 1
        %s131 = smul.addr %s130, 8
        %s132 = scalar_lea.vmem [#allocation2], %s131
        %s133 = smul.u32 8, %s19
        %p134 = scmp.lt.s32.totalorder %s133, 15
        %s135 = scalar_select %p134, %s133, 15
        %p136 = scmp.lt.s32.totalorder %s20, 0
        %s137 = scalar_select %p136, %s20, 0
        %s138 = sadd.s32 %s137, %s135
        %s139 = smul.addr %s138, 2
        %s140 = scalar_lea.vmem %s0, %s139
        %s141 = smul.u32 8, %s19
        %v142 = vld [vmem:[%s140] sm:$0x3]
        %v143 = vld [vmem:[%s140 + $0x2] sm:$0x3]
        %v144 = vld [vmem:[%s140 + $0x4] sm:$0x3]
        %v145 = vld [vmem:[%s140 + $0x6] sm:$0x3]
        %v146 = vld [vmem:[%s140 + $0x8] sm:$0x3]
        %v147 = vld [vmem:[%s140 + $0xa] sm:$0x3]
        %v148 = vld [vmem:[%s140 + $0xc] sm:$0x3]
        %v149 = vld [vmem:[%s140 + $0xe] sm:$0x3]
        %v150 = vxor.u32 %v142, 2147483648
        %v151 = vxor.u32 %v143, 2147483648
        %v152 = vxor.u32 %v144, 2147483648
        %v153 = vxor.u32 %v145, 2147483648
        %v154 = vxor.u32 %v146, 2147483648
        %v155 = vxor.u32 %v147, 2147483648
        %v156 = vxor.u32 %v148, 2147483648
        %v157 = vxor.u32 %v149, 2147483648
        %v158 = vmul.f32 %v150, 1.442695
        %v159 = vpow.pop %v158
        %v160 = vmul.f32 %v151, 1.442695
        %v161 = vpow.pop %v160
        %v162 = vmul.f32 %v152, 1.442695
        %v163 = vpow.pop %v162
        %v164 = vmul.f32 %v153, 1.442695
        %v165 = vpow.pop %v164
        %v166 = vmul.f32 %v154, 1.442695
        %v167 = vpow.pop %v166
        %v168 = vmul.f32 %v155, 1.442695
        %v169 = vpow.pop %v168
        %v170 = vmul.f32 %v156, 1.442695
        %v171 = vpow.pop %v170
        %v172 = vmul.f32 %v157, 1.442695
        %v173 = vpow.pop %v172
        %v174 = vadd.f32 %v159, 1.0
        %v175 = vadd.f32 %v161, 1.0
        %v176 = vadd.f32 %v163, 1.0
        %v177 = vadd.f32 %v165, 1.0
        %v178 = vadd.f32 %v167, 1.0
        %v179 = vadd.f32 %v169, 1.0
        %v180 = vadd.f32 %v171, 1.0
        %v181 = vadd.f32 %v173, 1.0
        %v182 = vrcp.pop %v174
        %v183 = vmul.f32 %v174, %v182
        %v184 = vsub.f32 1.0, %v183
        %v185 = vmul.f32 %v182, %v184
        %v186 = vadd.f32 %v182, %v185
        %vm187 = vweird.f32 %v174
        %vm188 = vweird.f32 %v182
        %vm189 = vmor %vm187, %vm188
        %v190 = vsel %vm189, %v182, %v186
        %v191 = vand.u32 2147483647, %v174
        %vm192 = vcmp.eq.f32.partialorder %v191, 8.507059e+37
        %v193 = vand.u32 %v174, 2147483648
        %v194 = vor.u32 1.1754944e-38, %v193
        %v195 = vsel %vm192, %v194, %v190
        %v196 = vmul.f32 1.0, %v195
        %v197 = vrcp.pop %v175
        %v198 = vmul.f32 %v175, %v197
        %v199 = vsub.f32 1.0, %v198
        %v200 = vmul.f32 %v197, %v199
        %v201 = vadd.f32 %v197, %v200
        %vm202 = vweird.f32 %v175
        %vm203 = vweird.f32 %v197
        %vm204 = vmor %vm202, %vm203
        %v205 = vsel %vm204, %v197, %v201
        %v206 = vand.u32 2147483647, %v175
        %vm207 = vcmp.eq.f32.partialorder %v206, 8.507059e+37
        %v208 = vand.u32 %v175, 2147483648
        %v209 = vor.u32 1.1754944e-38, %v208
        %v210 = vsel %vm207, %v209, %v205
        %v211 = vmul.f32 1.0, %v210
        %v212 = vrcp.pop %v176
        %v213 = vmul.f32 %v176, %v212
        %v214 = vsub.f32 1.0, %v213
        %v215 = vmul.f32 %v212, %v214
        %v216 = vadd.f32 %v212, %v215
        %vm217 = vweird.f32 %v176
        %vm218 = vweird.f32 %v212
        %vm219 = vmor %vm217, %vm218
        %v220 = vsel %vm219, %v212, %v216
        %v221 = vand.u32 2147483647, %v176
        %vm222 = vcmp.eq.f32.partialorder %v221, 8.507059e+37
        %v223 = vand.u32 %v176, 2147483648
        %v224 = vor.u32 1.1754944e-38, %v223
        %v225 = vsel %vm222, %v224, %v220
        %v226 = vmul.f32 1.0, %v225
        %v227 = vrcp.pop %v177
        %v228 = vmul.f32 %v177, %v227
        %v229 = vsub.f32 1.0, %v228
        %v230 = vmul.f32 %v227, %v229
        %v231 = vadd.f32 %v227, %v230
        %vm232 = vweird.f32 %v177
        %vm233 = vweird.f32 %v227
        %vm234 = vmor %vm232, %vm233
        %v235 = vsel %vm234, %v227, %v231
        %v236 = vand.u32 2147483647, %v177
        %vm237 = vcmp.eq.f32.partialorder %v236, 8.507059e+37
        %v238 = vand.u32 %v177, 2147483648
        %v239 = vor.u32 1.1754944e-38, %v238
        %v240 = vsel %vm237, %v239, %v235
        %v241 = vmul.f32 1.0, %v240
        %v242 = vrcp.pop %v178
        %v243 = vmul.f32 %v178, %v242
        %v244 = vsub.f32 1.0, %v243
        %v245 = vmul.f32 %v242, %v244
        %v246 = vadd.f32 %v242, %v245
        %vm247 = vweird.f32 %v178
        %vm248 = vweird.f32 %v242
        %vm249 = vmor %vm247, %vm248
        %v250 = vsel %vm249, %v242, %v246
        %v251 = vand.u32 2147483647, %v178
        %vm252 = vcmp.eq.f32.partialorder %v251, 8.507059e+37
        %v253 = vand.u32 %v178, 2147483648
        %v254 = vor.u32 1.1754944e-38, %v253
        %v255 = vsel %vm252, %v254, %v250
        %v256 = vmul.f32 1.0, %v255
        %v257 = vrcp.pop %v179
        %v258 = vmul.f32 %v179, %v257
        %v259 = vsub.f32 1.0, %v258
        %v260 = vmul.f32 %v257, %v259
        %v261 = vadd.f32 %v257, %v260
        %vm262 = vweird.f32 %v179
        %vm263 = vweird.f32 %v257
        %vm264 = vmor %vm262, %vm263
        %v265 = vsel %vm264, %v257, %v261
        %v266 = vand.u32 2147483647, %v179
        %vm267 = vcmp.eq.f32.partialorder %v266, 8.507059e+37
        %v268 = vand.u32 %v179, 2147483648
        %v269 = vor.u32 1.1754944e-38, %v268
        %v270 = vsel %vm267, %v269, %v265
        %v271 = vmul.f32 1.0, %v270
        %v272 = vrcp.pop %v180
        %v273 = vmul.f32 %v180, %v272
        %v274 = vsub.f32 1.0, %v273
        %v275 = vmul.f32 %v272, %v274
        %v276 = vadd.f32 %v272, %v275
        %vm277 = vweird.f32 %v180
        %vm278 = vweird.f32 %v272
        %vm279 = vmor %vm277, %vm278
        %v280 = vsel %vm279, %v272, %v276
        %v281 = vand.u32 2147483647, %v180
        %vm282 = vcmp.eq.f32.partialorder %v281, 8.507059e+37
        %v283 = vand.u32 %v180, 2147483648
        %v284 = vor.u32 1.1754944e-38, %v283
        %v285 = vsel %vm282, %v284, %v280
        %v286 = vmul.f32 1.0, %v285
        %v287 = vrcp.pop %v181
        %v288 = vmul.f32 %v181, %v287
        %v289 = vsub.f32 1.0, %v288
        %v290 = vmul.f32 %v287, %v289
        %v291 = vadd.f32 %v287, %v290
        %vm292 = vweird.f32 %v181
        %vm293 = vweird.f32 %v287
        %vm294 = vmor %vm292, %vm293
        %v295 = vsel %vm294, %v287, %v291
        %v296 = vand.u32 2147483647, %v181
        %vm297 = vcmp.eq.f32.partialorder %v296, 8.507059e+37
        %v298 = vand.u32 %v181, 2147483648
        %v299 = vor.u32 1.1754944e-38, %v298
        %v300 = vsel %vm297, %v299, %v295
        %v301 = vmul.f32 1.0, %v300
        %v310 = vrot.slane %v196, 1
        %v311 = vrot.slane %v211, 1
        %v312 = vrot.slane %v226, 1
        %v313 = vrot.slane %v241, 1
        %v314 = vrot.slane %v256, 1
        %v315 = vrot.slane %v271, 1
        %v316 = vrot.slane %v286, 1
        %v317 = vrot.slane %v301, 1
        %v326 = vmul.f32 %v142, %v310
        %v327 = vmul.f32 %v143, %v311
        %v328 = vmul.f32 %v144, %v312
        %v329 = vmul.f32 %v145, %v313
        %v330 = vmul.f32 %v146, %v314
        %v331 = vmul.f32 %v147, %v315
        %v332 = vmul.f32 %v148, %v316
        %v333 = vmul.f32 %v149, %v317
        %v342 = vrot.slane %v327, 7
        %vm343 = vcmask 1041409
        %v344 = vsel %vm343, %v342, %v326
        %v345 = vrot.slane %v328, 6
        %vm346 = vcmask 1042434
        %v347 = vsel %vm346, %v345, %v344
        %v348 = vrot.slane %v329, 5
        %vm349 = vcmask 1043459
        %v350 = vsel %vm349, %v348, %v347
        %v351 = vrot.slane %v330, 4
        %vm352 = vcmask 1044484
        %v353 = vsel %vm352, %v351, %v350
        %v354 = vrot.slane %v331, 3
        %vm355 = vcmask 1045509
        %v356 = vsel %vm355, %v354, %v353
        %v357 = vrot.slane %v332, 2
        %vm358 = vcmask 1046534
        %v359 = vsel %vm358, %v357, %v356
        %v360 = vrot.slane %v333, 1
        %vm361 = vcmask 1047559
        %v362 = vsel %vm361, %v360, %v359
        %vm364 = vcmask 261120
        %365 = vst.msk [vmem:[%s132] sm:$0xff] %vm364, %v362
        %s366 = sand.u32 %s65, 1
        %s367 = scalar_lea.sflag [#allocation3], %s366
        %s368 = sand.u32 %s65, 1
        %s369 = smul.addr %s368, 8
        %s370 = scalar_lea.vmem [#allocation2], %s369
        // Predicated region
        $region25: #{glu.1} parent=23 // pred_check
          %p371 = pneg %p75
        $region26: #{glu.1} parent=23 // pred_check_branch
          %373 = sbr.rel (%p371) target = $region28
        $region27: #{glu.1} parent=23 // pred_region
          %375 = vsyncadd %s367, 0
          %s376 = sadd.s32 %s20, %s19
          %s377 = smul.addr %s376, 8
          %s378 = scalar_lea.hbm %s1, %s377
          %s380 = sshll.u32 %s370, 4
          %s381 = int_to_ptr.vmem [resolvable:$true] %s380
          %s382 = sshll.u32 %s378, 4
          %s383 = int_to_ptr.hbm [resolvable:$true] %s382
          %385 = dma.vmem_to_hbm [thread:$0]  %s381, 128, %s383, %s367
        $region28: #{glu.1} parent=23 // pred_fallthru
          _
      $region24: #{glu.1} parent=5 // pred_fallthru
        _
      %p386 = scmp.le.s32.totalorder 2, %s10
      // Predicated region
      $region29: #{glu.1} parent=5 // pred_check
        %p387 = pneg %p386
      $region30: #{glu.1} parent=5 // pred_check_branch
        %389 = sbr.rel (%p387) target = $region32
      $region31: #{glu.1} parent=5 // pred_region
        %s390 = ssub.s32 %s10, 2
        // Predicated region
        $region33: #{glu.1} parent=31 // pred_check
          %p391 = pneg %p81
        $region34: #{glu.1} parent=31 // pred_check_branch
          %393 = sbr.rel (%p391) target = $region36
        $region35: #{glu.1} parent=31 // pred_region
          %s394 = sand.u32 %s66, 1
          %s395 = scalar_lea.sflag [#allocation3], %s394
          %s396 = sand.u32 %s66, 1
          %s397 = smul.addr %s396, 8
          %s398 = scalar_lea.vmem [#allocation2], %s397
          %400 = dma.done %s395, 128
        $region36: #{glu.1} parent=31 // pred_fallthru
          _
      $region32: #{glu.1} parent=5 // pred_fallthru
        _
    $region6: #{glu.1} parent=1 // loop_footer
      %s14 = sadd.s32 1, %s10
    $region7: #{glu.1} parent=1 // loop_footer_branch
      %9 = sbr.rel target = $region3
    $region8: #{glu.1} parent=1 // loop_exit
      _
    %401 = vsyncpa [#allocation3], 1
    %s402 = scalar_lea.sflag [#allocation3], 1
    %403 = vsyncpa %s402, 1

</llo_original>
